<compile_context>
chip_gen: v7x
topology: tpu7x:2x2x1
jax: 0.10.0
libtpu: 0.0.40
codegen_flags: <defaults>
</compile_context>

<pallas_src>
import functools

import jax
import jax.numpy as jnp
from jax.experimental import pallas as pl
from jax.experimental.pallas import tpu as pltpu

_EXTRA_ROWS = 8  # ones block appended to each conv operand (row 0 carries the bias)


def _choose_segs_per_block(B, L, target_lanes=1024):
    """Batch segments per grid step: wide lane tiles (>=128, <=~1024) whose
    boundaries always coincide with batch-segment boundaries."""
    if B * L <= target_lanes:
        return B
    best = B
    for s in range(1, B):
        if B % s == 0 and (s * L) % 128 == 0 and s * L <= target_lanes:
            best = s
    return best


def _model_kernel(x_ref, w1_ref, w2_ref, w3_ref, b3_ref, o_ref, hslab_ref, *,
                  seg_len, segs):
    """One grid step = `segs` batch segments as a (H, segs*L) slab:
    channels on sublanes, batch*time on lanes."""
    H, BLK = x_ref.shape
    L = seg_len

    # Lane bookkeeping: computed once, reused by both convs.
    lane_mod = jax.lax.broadcasted_iota(jnp.int32, (H, BLK), 1) % L
    not_seg_first = lane_mod != 0
    ones_blk = jnp.ones((_EXTRA_ROWS, BLK), jnp.float32)

    def conv_relu(h, w_aug, shift, last_valid):
        # k=3 / pad=1 conv (+ bias, folded into w_aug via the ones block) as ONE
        # MXU dot.  The three shifted taps + ones block are concatenated as a
        # VALUE (no staging scratch, no VMEM store->reload serialization).
        left = jnp.where(not_seg_first, pltpu.roll(h, shift=shift, axis=1), 0.0)
        right = jnp.where(lane_mod != last_valid,
                          pltpu.roll(h, shift=BLK - shift, axis=1), 0.0)
        op = jnp.concatenate([left, h, right, ones_blk], axis=0)   # (3H+8, BLK)
        y = jnp.dot(w_aug, op, preferred_element_type=jnp.float32)
        return jnp.maximum(y, 0.0)

    def maxpool2(y, stride):
        # MaxPool1d(2) kept uncompacted (VPU max + XLU roll, no MXU): valid
        # samples stay on lanes that are multiples of 2*stride.
        return jnp.maximum(y, pltpu.roll(y, shift=BLK - stride, axis=1))

    x = x_ref[...]

    # block1: Conv1d -> ReLU -> MaxPool1d(2)          (valid lanes: every 2nd)
    h = conv_relu(x, w1_ref[...], shift=1, last_valid=L - 1)
    h = maxpool2(h, 1)
    # TODO(synk): Dropout(0.2) reproduced as eval-mode identity (no RNG masking).

    # block2: Conv1d -> ReLU -> MaxPool1d(2)          (valid lanes: every 4th)
    h = conv_relu(h, w2_ref[...], shift=2, last_valid=L - 2)
    h = maxpool2(h, 2)

    # block3: Linear over the pooled time axis + Sigmoid.
    # Move batch segments to sublanes (static segment slices of the pooled slab
    # ref, concatenated along sublanes), then ONE dense dot against the
    # batch-independent zero-expanded (L, O) weight.  No O(B^2) weight, no MXU
    # columns that scale with batch.
    hslab_ref[...] = h
    hseg = jnp.concatenate(
        [hslab_ref[:, b * L:(b + 1) * L] for b in range(segs)], axis=0)  # (segs*H, L)
    out = jnp.dot(hseg, w3_ref[...], preferred_element_type=jnp.float32) + b3_ref[...]
    o_ref[...] = jax.nn.sigmoid(out)


def prepare_params(params, n_in, n_hidden, L):
    """ONE-TIME weight-side layout prep (hoisted out of the per-call path)."""
    w1, b1, w2, b2, w3, b3 = params
    H = n_hidden
    n_out, T = w3.shape
    assert n_in <= H
    assert L == 4 * H and T == L // 4, "nn.Linear(n_hidden,.) must see L//4 features"

    def fuse_conv(w, b):
        # (H, H, 3) conv weight -> (H, 3H+8) tap-major fused matrix; column 3H
        # carries the bias (matched by the in-kernel ones block), rest is 0.
        wcat = jnp.transpose(w, (0, 2, 1)).reshape(H, 3 * H)
        return jnp.concatenate(
            [wcat, b[:, None], jnp.zeros((H, _EXTRA_ROWS - 1), jnp.float32)],
            axis=1).astype(jnp.float32)

    w1p = jnp.pad(w1, ((0, 0), (0, H - n_in), (0, 0)))          # channel-pad to H
    w1aug = fuse_conv(w1p, b1)
    w2aug = fuse_conv(w2, b2)

    # Linear weight zero-expanded over the uncompacted pooled lane grid:
    # w3exp[4*t, o] = w3[o, t]; other rows 0.  Shape (L, n_out), independent of B.
    w3exp = jnp.zeros((L, n_out), jnp.float32).at[::4, :].set(w3.T)
    b3r = b3.reshape(1, n_out).astype(jnp.float32)
    return (w1aug, w2aug, w3exp, b3r)


@jax.jit
def model_forward(x, prepared):
    """Per-call path: one pad+transpose of x and a single pallas_call."""
    w1aug, w2aug, w3exp, b3r = prepared
    B, Cin, L = x.shape
    H = w1aug.shape[0]
    O = w3exp.shape[1]
    assert Cin <= H and w3exp.shape[0] == L and L % 4 == 0

    # activations: (B, Cin, L) -> channel-padded (H, B*L) slab, batch on lanes
    xp = jnp.pad(x, ((0, 0), (0, H - Cin), (0, 0)))
    x2d = jnp.transpose(xp, (1, 0, 2)).reshape(H, B * L)

    segs = _choose_segs_per_block(B, L)
    nblk = B // segs
    BLK = segs * L

    kernel = functools.partial(_model_kernel, seg_len=L, segs=segs)
    out2d = pl.pallas_call(
        kernel,
        out_shape=jax.ShapeDtypeStruct((B * H, O), jnp.float32),
        grid_spec=pltpu.PrefetchScalarGridSpec(
            num_scalar_prefetch=0,
            grid=(nblk,),                                   # batch-chunk grid
            in_specs=[
                pl.BlockSpec((H, BLK), lambda i: (0, i)),                  # x slab
                pl.BlockSpec((H, 3 * H + _EXTRA_ROWS), lambda i: (0, 0)),  # conv1 W|b
                pl.BlockSpec((H, 3 * H + _EXTRA_ROWS), lambda i: (0, 0)),  # conv2 W|b
                pl.BlockSpec((L, O), lambda i: (0, 0)),                    # Linear W (L,O)
                pl.BlockSpec((1, O), lambda i: (0, 0)),                    # b3
            ],
            out_specs=pl.BlockSpec((segs * H, O), lambda i: (i, 0)),
            scratch_shapes=[pltpu.VMEM((H, BLK), jnp.float32)],  # pooled slab
        ),
        compiler_params=pltpu.CompilerParams(
            dimension_semantics=("parallel",),       # v7x: 2 TCs split batch chunks
            vmem_limit_bytes=32 * 1024 * 1024),      # explicit budget (v7x-safe)
    )(x2d, w1aug, w2aug, w3exp, b3r)

    # rows are already ordered (b, h) -> plain reshape, no transpose needed.
    return out2d.reshape(B, H, O)


def reference_forward(x, params):
    """Pure-JAX reference with identical (eval-mode) semantics."""
    w1, b1, w2, b2, w3, b3 = params

    def conv1d(x, w, b):
        L = x.shape[-1]
        xp = jnp.pad(x, ((0, 0), (0, 0), (1, 1)))
        y = sum(jnp.einsum('oc,bcl->bol', w[:, :, k], xp[:, :, k:k + L])
                for k in range(3))
        return y + b[None, :, None]

    def pool(x):
        B, C, L = x.shape
        return x.reshape(B, C, L // 2, 2).max(-1)

    h = pool(jax.nn.relu(conv1d(x, w1, b1)))
    h = pool(jax.nn.relu(conv1d(h, w2, b2)))
    out = jnp.einsum('bht,ot->bho', h, w3) + b3[None, None, :]
    return jax.nn.sigmoid(out)


if __name__ == "__main__":
    B, n_in, n_hidden, n_out = 4, 4, 8, 6
    L = 4 * n_hidden            # = 32 so the Linear sees L//4 == n_hidden; B*L = 128 lanes
    T = L // 4

    key = jax.random.PRNGKey(0)
    ks = jax.random.split(key, 7)

    def uinit(k, shape, fan_in):
        bound = 1.0 / (fan_in ** 0.5)
        return jax.random.uniform(k, shape, jnp.float32, -bound, bound)

    w1 = uinit(ks[0], (n_hidden, n_in, 3), n_in * 3)
    b1 = uinit(ks[1], (n_hidden,), n_in * 3)
    w2 = uinit(ks[2], (n_hidden, n_hidden, 3), n_hidden * 3)
    b2 = uinit(ks[3], (n_hidden,), n_hidden * 3)
    w3 = uinit(ks[4], (n_out, T), T)
    b3 = uinit(ks[5], (n_out,), T)
    params = (w1, b1, w2, b2, w3, b3)

    x = jax.random.normal(ks[6], (B, n_in, L), jnp.float32)

    prepared = prepare_params(params, n_in, n_hidden, L)   # one-time weight prep

    out = jax.block_until_ready(model_forward(x, prepared))
    ref = jax.block_until_ready(reference_forward(x, params))

    assert out.shape == (B, n_hidden, n_out), out.shape
    assert jnp.allclose(out, ref, atol=2e-5, rtol=2e-5), "mismatch vs reference"
    print("KERNEL_OK")
</pallas_src>

<mosaic_0001>
module attributes {stable_mosaic.version = 11 : i64} {
  func.func @_model_kernel(%arg0: i32, %arg1: memref<8x128xf32, #tpu.memory_space<vmem>>, %arg2: memref<8x32xf32, #tpu.memory_space<vmem>>, %arg3: memref<8x32xf32, #tpu.memory_space<vmem>>, %arg4: memref<32x6xf32, #tpu.memory_space<vmem>>, %arg5: memref<1x6xf32, #tpu.memory_space<vmem>>, %arg6: memref<32x6xf32, #tpu.memory_space<vmem>>, %arg7: memref<8x128xf32, #tpu.memory_space<vmem>>) attributes {dimension_semantics = [#tpu.dimension_semantics<parallel>], iteration_bounds = array<i64: 1>, scalar_prefetch = 0 : i64, scratch_operands = 1 : i64, tpu.core_type = #tpu.core_type<tc>, window_params = [{transform_indices = @transform_0, window_bounds = array<i64: 8, 128>}, {pipeline_mode = #tpu.pipeline_mode<synchronous>, transform_indices = @transform_1, window_bounds = array<i64: 8, 32>}, {pipeline_mode = #tpu.pipeline_mode<synchronous>, transform_indices = @transform_2, window_bounds = array<i64: 8, 32>}, {pipeline_mode = #tpu.pipeline_mode<synchronous>, transform_indices = @transform_3, window_bounds = array<i64: 32, 6>}, {pipeline_mode = #tpu.pipeline_mode<synchronous>, transform_indices = @transform_4, window_bounds = array<i64: 1, 6>}, {transform_indices = @transform_5, window_bounds = array<i64: 32, 6>}]} {
    %0 = tpu.iota {dimensions = array<i32: 1>} : vector<8x128xi32>
    %c32_i32 = arith.constant 32 : i32
    %c0_i32 = arith.constant 0 : i32
    %1 = arith.cmpi eq, %c32_i32, %c0_i32 : i32
    %c1_i32 = arith.constant 1 : i32
    %2 = arith.select %1, %c1_i32, %c32_i32 : i32
    %3 = vector.broadcast %2 : i32 to vector<8x128xi32>
    %4 = arith.remsi %0, %3 : vector<8x128xi32>
    %c0_i32_0 = arith.constant 0 : i32
    %5 = vector.broadcast %c0_i32_0 : i32 to vector<8x128xi32>
    %6 = arith.cmpi ne, %4, %5 : vector<8x128xi32>
    %c0_i32_1 = arith.constant 0 : i32
    %7 = vector.broadcast %c0_i32_1 : i32 to vector<8x128xi32>
    %8 = arith.cmpi slt, %4, %7 : vector<8x128xi32>
    %c0_i32_2 = arith.constant 0 : i32
    %9 = arith.cmpi slt, %2, %c0_i32_2 : i32
    %10 = vector.broadcast %9 : i1 to vector<8x128xi1>
    %11 = vector.broadcast %10 : vector<8x128xi1> to vector<8x128xi1>
    %12 = arith.xori %8, %11 : vector<8x128xi1>
    %13 = arith.andi %12, %6 : vector<8x128xi1>
    %14 = vector.broadcast %2 : i32 to vector<8x128xi32>
    %15 = arith.addi %4, %14 : vector<8x128xi32>
    %16 = arith.select %13, %15, %4 : vector<8x128xi1>, vector<8x128xi32>
    %c0_i32_3 = arith.constant 0 : i32
    %17 = vector.broadcast %c0_i32_3 : i32 to vector<8x128xi32>
    %18 = arith.cmpi ne, %16, %17 : vector<8x128xi32>
    %cst = arith.constant 1.000000e+00 : f32
    %19 = vector.broadcast %cst : f32 to vector<8x128xf32>
    %c0 = arith.constant 0 : index
    %c0_4 = arith.constant 0 : index
    %20 = vector.load %arg1[%c0, %c0_4] : memref<8x128xf32, #tpu.memory_space<vmem>>, vector<8x128xf32>
    %c0_5 = arith.constant 0 : index
    %c0_6 = arith.constant 0 : index
    %21 = vector.load %arg2[%c0_5, %c0_6] : memref<8x32xf32, #tpu.memory_space<vmem>>, vector<8x32xf32>
    %c1_i32_7 = arith.constant 1 : i32
    %22 = tpu.dynamic_rotate %20 by %c1_i32_7 dim 1 : vector<8x128xf32>, i32 -> vector<8x128xf32>
    %cst_8 = arith.constant 0.000000e+00 : f32
    %23 = vector.broadcast %cst_8 : f32 to vector<8x128xf32>
    %24 = arith.select %18, %22, %23 : vector<8x128xi1>, vector<8x128xf32>
    %c31_i32 = arith.constant 31 : i32
    %25 = vector.broadcast %c31_i32 : i32 to vector<8x128xi32>
    %26 = arith.cmpi ne, %16, %25 : vector<8x128xi32>
    %c127_i32 = arith.constant 127 : i32
    %27 = tpu.dynamic_rotate %20 by %c127_i32 dim 1 : vector<8x128xf32>, i32 -> vector<8x128xf32>
    %cst_9 = arith.constant 0.000000e+00 : f32
    %28 = vector.broadcast %cst_9 : f32 to vector<8x128xf32>
    %29 = arith.select %26, %27, %28 : vector<8x128xi1>, vector<8x128xf32>
    %30 = tpu.concatenate %24, %20, %29, %19 in 0 : vector<8x128xf32>, vector<8x128xf32>, vector<8x128xf32>, vector<8x128xf32> -> vector<32x128xf32>
    %cst_10 = arith.constant dense<0.000000e+00> : vector<8x128xf32>
    %31 = tpu.matmul %21, %30, %cst_10 {dimension_numbers = #tpu.dot_dimension_numbers<[1], [0], [0], [1], [0, 0, 1, 1], [], []>} : vector<8x32xf32>, vector<32x128xf32>, vector<8x128xf32> -> vector<8x128xf32>
    %cst_11 = arith.constant 0.000000e+00 : f32
    %32 = vector.broadcast %cst_11 : f32 to vector<8x128xf32>
    %33 = arith.maximumf %31, %32 : vector<8x128xf32>
    %c127_i32_12 = arith.constant 127 : i32
    %34 = tpu.dynamic_rotate %33 by %c127_i32_12 dim 1 : vector<8x128xf32>, i32 -> vector<8x128xf32>
    %35 = arith.maximumf %33, %34 : vector<8x128xf32>
    %c0_13 = arith.constant 0 : index
    %c0_14 = arith.constant 0 : index
    %36 = vector.load %arg3[%c0_13, %c0_14] : memref<8x32xf32, #tpu.memory_space<vmem>>, vector<8x32xf32>
    %c2_i32 = arith.constant 2 : i32
    %37 = tpu.dynamic_rotate %35 by %c2_i32 dim 1 : vector<8x128xf32>, i32 -> vector<8x128xf32>
    %cst_15 = arith.constant 0.000000e+00 : f32
    %38 = vector.broadcast %cst_15 : f32 to vector<8x128xf32>
    %39 = arith.select %18, %37, %38 : vector<8x128xi1>, vector<8x128xf32>
    %c30_i32 = arith.constant 30 : i32
    %40 = vector.broadcast %c30_i32 : i32 to vector<8x128xi32>
    %41 = arith.cmpi ne, %16, %40 : vector<8x128xi32>
    %c126_i32 = arith.constant 126 : i32
    %42 = tpu.dynamic_rotate %35 by %c126_i32 dim 1 : vector<8x128xf32>, i32 -> vector<8x128xf32>
    %cst_16 = arith.constant 0.000000e+00 : f32
    %43 = vector.broadcast %cst_16 : f32 to vector<8x128xf32>
    %44 = arith.select %41, %42, %43 : vector<8x128xi1>, vector<8x128xf32>
    %45 = tpu.concatenate %39, %35, %44, %19 in 0 : vector<8x128xf32>, vector<8x128xf32>, vector<8x128xf32>, vector<8x128xf32> -> vector<32x128xf32>
    %cst_17 = arith.constant dense<0.000000e+00> : vector<8x128xf32>
    %46 = tpu.matmul %36, %45, %cst_17 {dimension_numbers = #tpu.dot_dimension_numbers<[1], [0], [0], [1], [0, 0, 1, 1], [], []>} : vector<8x32xf32>, vector<32x128xf32>, vector<8x128xf32> -> vector<8x128xf32>
    %cst_18 = arith.constant 0.000000e+00 : f32
    %47 = vector.broadcast %cst_18 : f32 to vector<8x128xf32>
    %48 = arith.maximumf %46, %47 : vector<8x128xf32>
    %c126_i32_19 = arith.constant 126 : i32
    %49 = tpu.dynamic_rotate %48 by %c126_i32_19 dim 1 : vector<8x128xf32>, i32 -> vector<8x128xf32>
    %50 = arith.maximumf %48, %49 : vector<8x128xf32>
    %c0_20 = arith.constant 0 : index
    %c0_21 = arith.constant 0 : index
    %51 = vector.load %arg7[%c0_20, %c0_21] : memref<8x128xf32, #tpu.memory_space<vmem>>, vector<8x128xf32>
    tpu.vector_store %arg7[%c0_20, %c0_21], %50 {strides = array<i32>} : memref<8x128xf32, #tpu.memory_space<vmem>>, vector<8x128xf32>,
    %c0_22 = arith.constant 0 : index
    %c0_23 = arith.constant 0 : index
    %52 = vector.load %arg7[%c0_22, %c0_23] : memref<8x128xf32, #tpu.memory_space<vmem>>, vector<8x32xf32>
    %c0_24 = arith.constant 0 : index
    %c32 = arith.constant 32 : index
    %53 = vector.load %arg7[%c0_24, %c32] : memref<8x128xf32, #tpu.memory_space<vmem>>, vector<8x32xf32>
    %c0_25 = arith.constant 0 : index
    %c64 = arith.constant 64 : index
    %54 = vector.load %arg7[%c0_25, %c64] : memref<8x128xf32, #tpu.memory_space<vmem>>, vector<8x32xf32>
    %c0_26 = arith.constant 0 : index
    %c96 = arith.constant 96 : index
    %55 = vector.load %arg7[%c0_26, %c96] : memref<8x128xf32, #tpu.memory_space<vmem>>, vector<8x32xf32>
    %56 = tpu.concatenate %52, %53, %54, %55 in 0 : vector<8x32xf32>, vector<8x32xf32>, vector<8x32xf32>, vector<8x32xf32> -> vector<32x32xf32>
    %c0_27 = arith.constant 0 : index
    %c0_28 = arith.constant 0 : index
    %57 = vector.load %arg4[%c0_27, %c0_28] : memref<32x6xf32, #tpu.memory_space<vmem>>, vector<32x6xf32>
    %cst_29 = arith.constant dense<0.000000e+00> : vector<32x6xf32>
    %58 = tpu.matmul %56, %57, %cst_29 {dimension_numbers = #tpu.dot_dimension_numbers<[1], [0], [0], [1], [0, 0, 1, 1], [], []>} : vector<32x32xf32>, vector<32x6xf32>, vector<32x6xf32> -> vector<32x6xf32>
    %c0_30 = arith.constant 0 : index
    %c0_31 = arith.constant 0 : index
    %59 = vector.load %arg5[%c0_30, %c0_31] : memref<1x6xf32, #tpu.memory_space<vmem>>, vector<1x6xf32>
    %60 = vector.broadcast %59 : vector<1x6xf32> to vector<32x6xf32>
    %61 = arith.addf %58, %60 : vector<32x6xf32>
    %62 = arith.negf %61 : vector<32x6xf32>
    %63 = math.exp %62 : vector<32x6xf32>
    %cst_32 = arith.constant 1.000000e+00 : f32
    %64 = vector.broadcast %cst_32 : f32 to vector<32x6xf32>
    %65 = arith.addf %64, %63 : vector<32x6xf32>
    %66 = arith.divf %64, %65 : vector<32x6xf32>
    %c0_33 = arith.constant 0 : index
    %c0_34 = arith.constant 0 : index
    %67 = vector.load %arg6[%c0_33, %c0_34] : memref<32x6xf32, #tpu.memory_space<vmem>>, vector<32x6xf32>
    tpu.vector_store %arg6[%c0_33, %c0_34], %66 {strides = array<i32>} : memref<32x6xf32, #tpu.memory_space<vmem>>, vector<32x6xf32>,
    return
  }
  func.func @transform_0(%arg0: i32) -> (i32, i32) {
    %c0_i32 = arith.constant 0 : i32
    %c0_i32_0 = arith.constant 0 : i32
    return %c0_i32, %arg0 : i32, i32
  }
  func.func @transform_1(%arg0: i32) -> (i32, i32) {
    %c0_i32 = arith.constant 0 : i32
    %c0_i32_0 = arith.constant 0 : i32
    %c0_i32_1 = arith.constant 0 : i32
    return %c0_i32, %c0_i32_0 : i32, i32
  }
  func.func @transform_2(%arg0: i32) -> (i32, i32) {
    %c0_i32 = arith.constant 0 : i32
    %c0_i32_0 = arith.constant 0 : i32
    %c0_i32_1 = arith.constant 0 : i32
    return %c0_i32, %c0_i32_0 : i32, i32
  }
  func.func @transform_3(%arg0: i32) -> (i32, i32) {
    %c0_i32 = arith.constant 0 : i32
    %c0_i32_0 = arith.constant 0 : i32
    %c0_i32_1 = arith.constant 0 : i32
    return %c0_i32, %c0_i32_0 : i32, i32
  }
  func.func @transform_4(%arg0: i32) -> (i32, i32) {
    %c0_i32 = arith.constant 0 : i32
    %c0_i32_0 = arith.constant 0 : i32
    %c0_i32_1 = arith.constant 0 : i32
    return %c0_i32, %c0_i32_0 : i32, i32
  }
  func.func @transform_5(%arg0: i32) -> (i32, i32) {
    %c0_i32 = arith.constant 0 : i32
    %c0_i32_0 = arith.constant 0 : i32
    return %arg0, %c0_i32 : i32, i32
  }
}

</mosaic_0001>

<llo_original>
// kernel: model_forward.1
$region0: #{model_forward.1}
  #allocation0 [shape = 'u32[]', space=smem, size = 0x4, offset = 0x4, fixed_abs, tag = 'smem constant byte address 0x4 - core index']
  #allocation1 [shape = 'u32[144,128]{1,0:T(1,128)}', space=vmem, size = 0x12000, scoped, tag = 'internal scratch']
  #allocation2 [shape = 'f32[8,128]{1,0:T(8,128)}', space=vmem, size = 0x1000, scoped, tag = 'scratch operand']
  %s0 = inlined_call_operand.vmem [shape: f32[8,128], index: 0, kind: input, shape index: {}]
  %s1 = inlined_call_operand.vmem [shape: f32[8,32], index: 1, kind: input, shape index: {}]
  %s2 = inlined_call_operand.vmem [shape: f32[8,32], index: 2, kind: input, shape index: {}]
  %s3 = inlined_call_operand.vmem [shape: f32[32,6], index: 3, kind: input, shape index: {}]
  %s4 = inlined_call_operand.vmem [shape: f32[1,6], index: 4, kind: input, shape index: {}]
  %s5 = inlined_call_operand.vmem [shape: f32[32,6], index: 5, kind: output, shape index: {}]
  %s6 = sld [smem:[#allocation0]]
  $region30: #{model_forward.1} parent=0
    _
  %s8 = ssub.s32 1, %s6
  %s9 = scalar_select 0, %s8, %s6
  // Predicated region
  $region2: #{model_forward.1} parent=0 // pred_check
    _
  $region3: #{model_forward.1} parent=0 // pred_check_branch
    %11 = sbr.rel (0) target = $region5
  $region4: #{model_forward.1} parent=0 // pred_region
    _
  $region5: #{model_forward.1} parent=0 // pred_fallthru
    _
  // Predicated region
  $region6: #{model_forward.1} parent=0 // pred_check
    _
  $region7: #{model_forward.1} parent=0 // pred_check_branch
    %13 = sbr.rel (0) target = $region9
  $region8: #{model_forward.1} parent=0 // pred_region
    _
  $region9: #{model_forward.1} parent=0 // pred_fallthru
    _
  // Predicated region
  $region10: #{model_forward.1} parent=0 // pred_check
    _
  $region11: #{model_forward.1} parent=0 // pred_check_branch
    %15 = sbr.rel (0) target = $region13
  $region12: #{model_forward.1} parent=0 // pred_region
    _
  $region13: #{model_forward.1} parent=0 // pred_fallthru
    _
  // Predicated region
  $region14: #{model_forward.1} parent=0 // pred_check
    _
  $region15: #{model_forward.1} parent=0 // pred_check_branch
    %17 = sbr.rel (0) target = $region17
  $region16: #{model_forward.1} parent=0 // pred_region
    _
  $region17: #{model_forward.1} parent=0 // pred_fallthru
    _
  // Predicated region
  $region18: #{model_forward.1} parent=0 // pred_check
    _
  $region19: #{model_forward.1} parent=0 // pred_check_branch
    %19 = sbr.rel (0) target = $region21
  $region20: #{model_forward.1} parent=0 // pred_region
    _
  $region21: #{model_forward.1} parent=0 // pred_fallthru
    _
  %v20 = vlaneseq
  %v21 = vand.u32 %v20, 127
  %vm22 = vcmp.lt.s32.totalorder %v21, 0
  %v23 = vsub.s32 0, %v21
  %v24 = vsel %vm22, %v23, %v21
  %v25 = vshrl.u32 %v24, 5
  %v26 = vand.u32 %v24, 31
  %v27 = vsub.s32 0, %v26
  %v28 = vsel %vm22, %v27, %v26
  %vm29 = vcmp.ne.s32.totalorder %v28, 0
  %vm30 = vcmp.lt.s32.totalorder %v28, 0
  %vm31 = vmand %vm30, %vm29
  %v32 = vadd.s32 %v28, 32
  %v33 = vsel %vm31, %v32, %v28
  %vm34 = vcmp.ne.s32.totalorder %v33, 0
  %v35 = vld [vmem:[%s0] sm:$0xff]
  %v36 = vld [vmem:[%s1] sm:$0xff]
  %37 = vrot.lane.b32.xlu0 %v35, 1
  %v38 = vpop.permute.xlu0 %37
  %v39 = vsel %vm34, %v38, 0.0
  %vm40 = vcmp.ne.s32.totalorder %v33, 31
  %41 = vrot.lane.b32.xlu0 %v35, 127
  %v42 = vpop.permute.xlu0 %41
  %v43 = vsel %vm40, %v42, 0.0
  %vm44 = vcmask 261120
  %v46 = vsel %vm44, %v36, 0
  %48 = vmatprep.subr.mxu0 0.0
  %49 = vmatpush1.msra.mxu0 %v39
  %50 = vmatprep.subr.mxu0 0.0
  %51 = vmatpush1.msra.mxu0 %v35
  %52 = vmatprep.subr.mxu0 0.0
  %53 = vmatpush1.msra.mxu0 %v43
  %54 = vmatprep.subr.mxu0 0.0
  %55 = vmatpush1.msra.mxu0 1.0
  %56 = vmatprep.subr.mxu0 0.0
  %57 = vmatpush1.msra.mxu0 0.0
  %58 = vmatprep.subr.mxu0 0.0
  %59 = vmatpush1.msra.mxu0 0.0
  %60 = vmatprep.subr.mxu0 0.0
  %61 = vmatpush1.msra.mxu0 0.0
  %62 = vmatprep.subr.mxu0 0.0
  %63 = vmatpush1.msra.mxu0 0.0
  %64 = vmatprep.subr.mxu0 0.0
  %65 = vmatpush1.msra.mxu0 0.0
  %66 = vmatprep.subr.mxu0 0.0
  %67 = vmatpush1.msra.mxu0 0.0
  %68 = vmatprep.subr.mxu0 0.0
  %69 = vmatpush1.msra.mxu0 0.0
  %70 = vmatprep.subr.mxu0 0.0
  %71 = vmatpush1.msra.mxu0 0.0
  %72 = vmatprep.subr.mxu0 0.0
  %73 = vmatpush1.msra.mxu0 0.0
  %74 = vmatprep.subr.mxu0 0.0
  %75 = vmatpush1.msra.mxu0 0.0
  %76 = vmatprep.subr.mxu0 0.0
  %77 = vmatpush1.msra.mxu0 0.0
  %78 = vmatprep.subr.mxu0 0.0
  %79 = vmatpush1.msra.mxu0 0.0
  %80 = vmatprep.subr.mxu0 0.0
  %81 = vmatpush1.msra.mxu0 0.0
  %82 = vmatprep.subr.mxu0 0.0
  %83 = vmatpush1.msra.mxu0 0.0
  %84 = vmatprep.subr.mxu0 0.0
  %85 = vmatpush1.msra.mxu0 0.0
  %86 = vmatprep.subr.mxu0 0.0
  %87 = vmatpush1.msra.mxu0 0.0
  %88 = vmatprep.subr.mxu0 0.0
  %89 = vmatpush1.msra.mxu0 0.0
  %90 = vmatprep.subr.mxu0 0.0
  %91 = vmatpush1.msra.mxu0 0.0
  %92 = vmatprep.subr.mxu0 0.0
  %93 = vmatpush1.msra.mxu0 0.0
  %94 = vmatprep.subr.mxu0 0.0
  %95 = vmatpush1.msra.mxu0 0.0
  %96 = vmatprep.subr.mxu0 0.0
  %97 = vmatpush1.msra.mxu0 0.0
  %98 = vmatprep.subr.mxu0 0.0
  %99 = vmatpush1.msra.mxu0 0.0
  %100 = vmatprep.subr.mxu0 0.0
  %101 = vmatpush1.msra.mxu0 0.0
  %102 = vmatprep.subr.mxu0 0.0
  %103 = vmatpush1.msra.mxu0 0.0
  %104 = vmatprep.subr.mxu0 0.0
  %105 = vmatpush1.msra.mxu0 0.0
  %106 = vmatprep.subr.mxu0 0.0
  %107 = vmatpush1.msra.mxu0 0.0
  %108 = vmatprep.subr.mxu0 0.0
  %109 = vmatpush1.msra.mxu0 0.0
  %110 = vmatprep.subr.mxu0 0.0
  %111 = vmatpush1.msra.mxu0 0.0
  %112 = vmatprep.mubr.f32.mxu0 0.0
  %113 = vmatmul.mubr.f32.gmra.mrb[0].mxu0 %v46
  %v114 = vpop.f32.mrb[0].mxu0
  %v115 = vadd.f32 0.0, %v114
  %v116 = vpop.f32.mrb[0].mxu0
  %117 = vdwg.mxu0
  %v118 = vmax.f32 %v115, 0.0
  %119 = vrot.lane.b32.xlu0 %v118, 127
  %v120 = vpop.permute.xlu0 %119
  %v121 = vmax.f32 %v118, %v120
  %v122 = vld [vmem:[%s2] sm:$0xff]
  %123 = vrot.lane.b32.xlu0 %v121, 2
  %v124 = vpop.permute.xlu0 %123
  %v125 = vsel %vm34, %v124, 0.0
  %vm126 = vcmp.ne.s32.totalorder %v33, 30
  %127 = vrot.lane.b32.xlu0 %v121, 126
  %v128 = vpop.permute.xlu0 %127
  %v129 = vsel %vm126, %v128, 0.0
  %v131 = vsel %vm44, %v122, 0
  %133 = vmatprep.subr.mxu0 0.0
  %134 = vmatpush1.msra.mxu0 %v125
  %135 = vmatprep.subr.mxu0 0.0
  %136 = vmatpush1.msra.mxu0 %v121
  %137 = vmatprep.subr.mxu0 0.0
  %138 = vmatpush1.msra.mxu0 %v129
  %139 = vmatprep.subr.mxu0 0.0
  %140 = vmatpush1.msra.mxu0 1.0
  %141 = vmatprep.subr.mxu0 0.0
  %142 = vmatpush1.msra.mxu0 0.0
  %143 = vmatprep.subr.mxu0 0.0
  %144 = vmatpush1.msra.mxu0 0.0
  %145 = vmatprep.subr.mxu0 0.0
  %146 = vmatpush1.msra.mxu0 0.0
  %147 = vmatprep.subr.mxu0 0.0
  %148 = vmatpush1.msra.mxu0 0.0
  %149 = vmatprep.subr.mxu0 0.0
  %150 = vmatpush1.msra.mxu0 0.0
  %151 = vmatprep.subr.mxu0 0.0
  %152 = vmatpush1.msra.mxu0 0.0
  %153 = vmatprep.subr.mxu0 0.0
  %154 = vmatpush1.msra.mxu0 0.0
  %155 = vmatprep.subr.mxu0 0.0
  %156 = vmatpush1.msra.mxu0 0.0
  %157 = vmatprep.subr.mxu0 0.0
  %158 = vmatpush1.msra.mxu0 0.0
  %159 = vmatprep.subr.mxu0 0.0
  %160 = vmatpush1.msra.mxu0 0.0
  %161 = vmatprep.subr.mxu0 0.0
  %162 = vmatpush1.msra.mxu0 0.0
  %163 = vmatprep.subr.mxu0 0.0
  %164 = vmatpush1.msra.mxu0 0.0
  %165 = vmatprep.subr.mxu0 0.0
  %166 = vmatpush1.msra.mxu0 0.0
  %167 = vmatprep.subr.mxu0 0.0
  %168 = vmatpush1.msra.mxu0 0.0
  %169 = vmatprep.subr.mxu0 0.0
  %170 = vmatpush1.msra.mxu0 0.0
  %171 = vmatprep.subr.mxu0 0.0
  %172 = vmatpush1.msra.mxu0 0.0
  %173 = vmatprep.subr.mxu0 0.0
  %174 = vmatpush1.msra.mxu0 0.0
  %175 = vmatprep.subr.mxu0 0.0
  %176 = vmatpush1.msra.mxu0 0.0
  %177 = vmatprep.subr.mxu0 0.0
  %178 = vmatpush1.msra.mxu0 0.0
  %179 = vmatprep.subr.mxu0 0.0
  %180 = vmatpush1.msra.mxu0 0.0
  %181 = vmatprep.subr.mxu0 0.0
  %182 = vmatpush1.msra.mxu0 0.0
  %183 = vmatprep.subr.mxu0 0.0
  %184 = vmatpush1.msra.mxu0 0.0
  %185 = vmatprep.subr.mxu0 0.0
  %186 = vmatpush1.msra.mxu0 0.0
  %187 = vmatprep.subr.mxu0 0.0
  %188 = vmatpush1.msra.mxu0 0.0
  %189 = vmatprep.subr.mxu0 0.0
  %190 = vmatpush1.msra.mxu0 0.0
  %191 = vmatprep.subr.mxu0 0.0
  %192 = vmatpush1.msra.mxu0 0.0
  %193 = vmatprep.subr.mxu0 0.0
  %194 = vmatpush1.msra.mxu0 0.0
  %195 = vmatprep.subr.mxu0 0.0
  %196 = vmatpush1.msra.mxu0 0.0
  %197 = vmatprep.mubr.f32.mxu0 0.0
  %198 = vmatmul.mubr.f32.gmra.mrb[0].mxu0 %v131
  %v199 = vpop.f32.mrb[0].mxu0
  %v200 = vadd.f32 0.0, %v199
  %v201 = vpop.f32.mrb[0].mxu0
  %202 = vdwg.mxu0
  %v203 = vmax.f32 %v200, 0.0
  %204 = vrot.lane.b32.xlu0 %v203, 126
  %v205 = vpop.permute.xlu0 %204
  %v206 = vmax.f32 %v203, %v205
  %207 = vst [vmem:[#allocation2] sm:$0xff] %v206
  %v208 = vld [vmem:[#allocation2] sm:$0xff]
  %210 = vrot.lane.b32.xlu0 %v208, 96
  %v211 = vpop.permute.xlu0 %210
  %212 = vrot.lane.b32.xlu0 %v208, 64
  %v213 = vpop.permute.xlu0 %212
  %214 = vrot.lane.b32.xlu0 %v208, 32
  %v215 = vpop.permute.xlu0 %214
  %v216 = vld [vmem:[%s3] sm:$0xff]
  %v217 = vld [vmem:[%s3 + $0x8] sm:$0xff]
  %v218 = vld [vmem:[%s3 + $0x10] sm:$0xff]
  %v219 = vld [vmem:[%s3 + $0x18] sm:$0xff]
  %v220 = vld [vmem:[%s4] sm:$0x1]
  %v222 = vlaneseq
  %v223 = vshrl.u32 %v222, 7
  %v224 = vsub.s32 0, %v223
  %v225 = vrot.slane %v220, %v224
  %v227 = vsel %vm44, %v208, 0
  %v229 = vsel %vm44, %v211, 0
  %v231 = vsel %vm44, %v213, 0
  %v233 = vsel %vm44, %v215, 0
  %235 = vmatprep.subr.mxu0 0.0
  %236 = vmatpush1.msra.mxu0 %v216
  %237 = vmatprep.subr.mxu0 0.0
  %238 = vmatpush1.msra.mxu0 %v217
  %239 = vmatprep.subr.mxu0 0.0
  %240 = vmatpush1.msra.mxu0 %v218
  %241 = vmatprep.subr.mxu0 0.0
  %242 = vmatpush1.msra.mxu0 %v219
  %243 = vmatprep.subr.mxu0 0.0
  %244 = vmatpush1.msra.mxu0 0.0
  %245 = vmatprep.subr.mxu0 0.0
  %246 = vmatpush1.msra.mxu0 0.0
  %247 = vmatprep.subr.mxu0 0.0
  %248 = vmatpush1.msra.mxu0 0.0
  %249 = vmatprep.subr.mxu0 0.0
  %250 = vmatpush1.msra.mxu0 0.0
  %251 = vmatprep.subr.mxu0 0.0
  %252 = vmatpush1.msra.mxu0 0.0
  %253 = vmatprep.subr.mxu0 0.0
  %254 = vmatpush1.msra.mxu0 0.0
  %255 = vmatprep.subr.mxu0 0.0
  %256 = vmatpush1.msra.mxu0 0.0
  %257 = vmatprep.subr.mxu0 0.0
  %258 = vmatpush1.msra.mxu0 0.0
  %259 = vmatprep.subr.mxu0 0.0
  %260 = vmatpush1.msra.mxu0 0.0
  %261 = vmatprep.subr.mxu0 0.0
  %262 = vmatpush1.msra.mxu0 0.0
  %263 = vmatprep.subr.mxu0 0.0
  %264 = vmatpush1.msra.mxu0 0.0
  %265 = vmatprep.subr.mxu0 0.0
  %266 = vmatpush1.msra.mxu0 0.0
  %267 = vmatprep.subr.mxu0 0.0
  %268 = vmatpush1.msra.mxu0 0.0
  %269 = vmatprep.subr.mxu0 0.0
  %270 = vmatpush1.msra.mxu0 0.0
  %271 = vmatprep.subr.mxu0 0.0
  %272 = vmatpush1.msra.mxu0 0.0
  %273 = vmatprep.subr.mxu0 0.0
  %274 = vmatpush1.msra.mxu0 0.0
  %275 = vmatprep.subr.mxu0 0.0
  %276 = vmatpush1.msra.mxu0 0.0
  %277 = vmatprep.subr.mxu0 0.0
  %278 = vmatpush1.msra.mxu0 0.0
  %279 = vmatprep.subr.mxu0 0.0
  %280 = vmatpush1.msra.mxu0 0.0
  %281 = vmatprep.subr.mxu0 0.0
  %282 = vmatpush1.msra.mxu0 0.0
  %283 = vmatprep.subr.mxu0 0.0
  %284 = vmatpush1.msra.mxu0 0.0
  %285 = vmatprep.subr.mxu0 0.0
  %286 = vmatpush1.msra.mxu0 0.0
  %287 = vmatprep.subr.mxu0 0.0
  %288 = vmatpush1.msra.mxu0 0.0
  %289 = vmatprep.subr.mxu0 0.0
  %290 = vmatpush1.msra.mxu0 0.0
  %291 = vmatprep.subr.mxu0 0.0
  %292 = vmatpush1.msra.mxu0 0.0
  %293 = vmatprep.subr.mxu0 0.0
  %294 = vmatpush1.msra.mxu0 0.0
  %295 = vmatprep.subr.mxu0 0.0
  %296 = vmatpush1.msra.mxu0 0.0
  %297 = vmatprep.subr.mxu0 0.0
  %298 = vmatpush1.msra.mxu0 0.0
  %299 = vmatprep.mubr.f32.mxu0 0.0
  %300 = vmatmul.mubr.f32.gmra.mrb[0].mxu0 %v227
  %v301 = vpop.f32.mrb[0].mxu0
  %v302 = vadd.f32 %v225, %v301
  %v303 = vpop.f32.mrb[0].mxu0
  %304 = vmatprep.mubr.f32.mxu0 0.0
  %305 = vmatmul.mubr.f32.gmra.mrb[0].mxu0 %v229
  %v306 = vpop.f32.mrb[0].mxu0
  %v307 = vadd.f32 %v225, %v306
  %v308 = vpop.f32.mrb[0].mxu0
  %309 = vmatprep.mubr.f32.mxu0 0.0
  %310 = vmatmul.mubr.f32.gmra.mrb[0].mxu0 %v231
  %v311 = vpop.f32.mrb[0].mxu0
  %v312 = vadd.f32 %v225, %v311
  %v313 = vpop.f32.mrb[0].mxu0
  %314 = vmatprep.mubr.f32.mxu0 0.0
  %315 = vmatmul.mubr.f32.gmra.mrb[0].mxu0 %v233
  %v316 = vpop.f32.mrb[0].mxu0
  %v317 = vadd.f32 %v225, %v316
  %v318 = vpop.f32.mrb[0].mxu0
  %319 = vdwg.mxu0
  %v320 = vxor.u32 %v302, 2147483648
  %v321 = vxor.u32 %v307, 2147483648
  %v322 = vxor.u32 %v312, 2147483648
  %v323 = vxor.u32 %v317, 2147483648
  %v324 = vmul.f32 %v320, 1.442695
  %v325 = vpow.pop %v324
  %v326 = vmul.f32 %v321, 1.442695
  %v327 = vpow.pop %v326
  %v328 = vmul.f32 %v322, 1.442695
  %v329 = vpow.pop %v328
  %v330 = vmul.f32 %v323, 1.442695
  %v331 = vpow.pop %v330
  %v332 = vadd.f32 %v325, 1.0
  %v333 = vadd.f32 %v327, 1.0
  %v334 = vadd.f32 %v329, 1.0
  %v335 = vadd.f32 %v331, 1.0
  %v336 = vrcp.pop %v332
  %v337 = vmul.f32 1.0, %v336
  %v338 = vrcp.pop %v333
  %v339 = vmul.f32 1.0, %v338
  %v340 = vrcp.pop %v334
  %v341 = vmul.f32 1.0, %v340
  %v342 = vrcp.pop %v335
  %v343 = vmul.f32 1.0, %v342
  %vm344 = vcmask 48128
  %345 = vst.msk [vmem:[%s5] sm:$0xff] %vm344, %v337
  %346 = vst.msk [vmem:[%s5 + $0x8] sm:$0xff] %vm344, %v339
  %347 = vst.msk [vmem:[%s5 + $0x10] sm:$0xff] %vm344, %v341
  %348 = vst.msk [vmem:[%s5 + $0x18] sm:$0xff] %vm344, %v343
  // Predicated region
  $region22: #{model_forward.1} parent=0 // pred_check
    _
  $region23: #{model_forward.1} parent=0 // pred_check_branch
    %350 = sbr.rel (0) target = $region25
  $region24: #{model_forward.1} parent=0 // pred_region
    _
  $region25: #{model_forward.1} parent=0 // pred_fallthru
    _
  // Predicated region
  $region26: #{model_forward.1} parent=0 // pred_check
    _
  $region27: #{model_forward.1} parent=0 // pred_check_branch
    %352 = sbr.rel (0) target = $region29
  $region28: #{model_forward.1} parent=0 // pred_region
    _
  $region29: #{model_forward.1} parent=0 // pred_fallthru
    _

</llo_original>
